<compile_context>
chip_gen: v7x
topology: tpu7x:2x2x1
jax: 0.10.0
libtpu: 0.0.40
codegen_flags: <defaults>
</compile_context>

<pallas_src>
import jax
import jax.numpy as jnp
from jax.experimental import pallas as pl
from jax.experimental.pallas import tpu as pltpu

BETA = 8.0
M = 0.5


def _vmem_capacity_bytes():
    """Physical VMEM per TensorCore; conservative (v7x) fallback if unavailable."""
    try:
        return int(pltpu.get_tpu_info().vmem_capacity_bytes)
    except Exception:
        return 64 * 1024 * 1024


def _pick_tile_b(B, C, logits_itemsize, labels_itemsize, vmem_budget_bytes):
    """Largest multiple-of-8 row tile fitting the per-TensorCore VMEM budget.

    Budget covers the double-buffered input DMA copies of both operands plus
    ~5 full-tile f32 temporaries live inside the kernel body.
    """
    if B <= 8:
        return B  # block dim equal to full array dim is always legal
    bytes_per_row = C * (2 * (logits_itemsize + labels_itemsize) + 5 * 4)
    rows = vmem_budget_bytes // max(1, bytes_per_row)
    rows = max(8, min(rows, B))
    return (rows // 8) * 8


def _make_relahash_kernel(num_rows, tile_b, num_classes):
    def kernel(logits_ref, labels_ref, partial_ref):
        i = pl.program_id(0)

        # In-kernel casts (VPU has slack in a mem-bound kernel); math in f32.
        logits = logits_ref[...].astype(jnp.float32)
        labels = labels_ref[...].astype(jnp.float32)

        # margin_logits = beta * (logits - labels * m)
        margin = BETA * (logits - labels * M)

        # Numerically stable log-sum-exp along the class dim -> (tile_b, 1).
        mx = jnp.max(margin, axis=1, keepdims=True)
        lse = jnp.log(jnp.sum(jnp.exp(margin - mx), axis=1, keepdims=True))

        # Fused softmax cross entropy:
        #   log_softmax = margin - mx - lse, and sum(labels_scaled) == 1
        #   => per_row = (mx + lse) - sum(labels_fixed * margin) / denom
        # All-zero-label rows (labels -> ones, denom -> C) are handled by
        # selecting between row reductions instead of a full-tile where/divide
        # (valid because one/multi-hot labels are non-negative).
        row_sum = jnp.sum(labels, axis=1, keepdims=True)
        dot_lab = jnp.sum(labels * margin, axis=1, keepdims=True)
        dot_all = jnp.sum(margin, axis=1, keepdims=True)

        all_zero = row_sum == 0.0
        numer = jnp.where(all_zero, dot_all, dot_lab)
        denom = jnp.where(all_zero, jnp.float32(num_classes), row_sum)

        # Per-row cross entropy (exact reciprocal: denom is a >=1 label count).
        per_row = (mx + lse) - numer * pl.reciprocal(denom, approx=False)

        # Mask rows past the true batch size (ragged last tile). Keep this mask
        # immediately adjacent to per_row: padded garbage rows may be inf/NaN.
        row_ids = i * tile_b + jax.lax.broadcasted_iota(jnp.int32, (tile_b, 1), 0)
        per_row = jnp.where(row_ids < num_rows, per_row, 0.0)

        tile_sum = jnp.sum(per_row)

        # Lane-dense (1, 8, 128) store: tile sum at [0, 0, 0], zeros elsewhere,
        # so the wrapper epilogue is a plain dense jnp.sum (no strided gather,
        # no replication rounding error).
        sub = jax.lax.broadcasted_iota(jnp.int32, partial_ref.shape, 1)
        lane = jax.lax.broadcasted_iota(jnp.int32, partial_ref.shape, 2)
        slab = jnp.full(partial_ref.shape, tile_sum, dtype=jnp.float32)
        partial_ref[...] = jnp.where((sub == 0) & (lane == 0), slab, 0.0)

    return kernel


def relahash_loss(logits, z, labels):
    """logits: (B, C); labels: (B, C) one/multi-hot (any dtype); z unused."""
    del z  # unused by the loss, mirrors the PyTorch forward
    B, C = logits.shape

    # Generation-aware VMEM plan.
    vmem_cap = _vmem_capacity_bytes()
    tile_budget = vmem_cap // 2           # tile-sizing budget
    vmem_limit = (vmem_cap * 3) // 4      # scoped limit with headroom

    tile_b = _pick_tile_b(
        B, C, logits.dtype.itemsize, labels.dtype.itemsize, tile_budget)
    num_tiles = pl.cdiv(B, tile_b)

    bytes_in = B * C * (logits.dtype.itemsize + labels.dtype.itemsize)
    cost = pl.CostEstimate(
        flops=8 * B * C,
        transcendentals=B * C + 2 * B,
        bytes_accessed=bytes_in + num_tiles * 8 * 128 * 4,
    )

    kernel = _make_relahash_kernel(B, tile_b, C)

    partials = pl.pallas_call(
        kernel,
        out_shape=jax.ShapeDtypeStruct((num_tiles, 8, 128), jnp.float32),
        grid=(num_tiles,),
        in_specs=[
            pl.BlockSpec((tile_b, C), lambda i: (i, 0)),
            pl.BlockSpec((tile_b, C), lambda i: (i, 0)),
        ],
        out_specs=pl.BlockSpec((1, 8, 128), lambda i: (i, 0, 0)),
        compiler_params=pltpu.CompilerParams(
            dimension_semantics=("parallel",),
            vmem_limit_bytes=int(vmem_limit),
        ),
        cost_estimate=cost,
    )(logits, labels)

    # Dense epilogue: only [i, 0, 0] entries are nonzero; mean over the TRUE B.
    return jnp.sum(partials) / jnp.float32(B)


def _reference_loss(logits, labels):
    logits = logits.astype(jnp.float32)
    labels = labels.astype(jnp.float32)
    margin = BETA * (logits - labels * M)
    log_sm = jax.nn.log_softmax(margin, axis=1)
    lbl = jnp.where(jnp.all(labels == 0, axis=1, keepdims=True), 1.0, labels)
    lbl_scaled = lbl / jnp.sum(lbl, axis=1, keepdims=True)
    return jnp.mean(-jnp.sum(lbl_scaled * log_sm, axis=1))


if __name__ == "__main__":
    key = jax.random.PRNGKey(0)
    k1, k2, k3, k4, k5 = jax.random.split(key, 5)

    # ---- test 1: small one-hot case (matches the module's demo-scale usage) ----
    B, C, ZDIM = 8, 16, 32
    logits = jax.random.normal(k1, (B, C), dtype=jnp.float32)
    z = jax.random.normal(k2, (B, ZDIM), dtype=jnp.float32)  # unused by the loss
    label_idx = jax.random.randint(k3, (B,), 0, C)
    labels = jax.nn.one_hot(label_idx, C, dtype=jnp.float32)

    loss = relahash_loss(logits, z, labels)
    jax.block_until_ready(loss)
    ref = _reference_loss(logits, labels)
    assert jnp.allclose(loss, ref, atol=1e-5, rtol=1e-5), (loss, ref)

    # ---- test 2: ragged batch, bf16 logits + bf16 multi-hot labels (with an
    # all-zero row), exercising the narrow-dtype and masked-last-tile paths ----
    B2, C2 = 20, 128
    logits2 = jax.random.normal(k4, (B2, C2), dtype=jnp.bfloat16)
    labels2 = jax.random.bernoulli(k5, 0.05, (B2, C2)).astype(jnp.bfloat16)
    labels2 = labels2.at[3].set(0)  # exercise the all-zero-label path
    loss2 = relahash_loss(logits2, None, labels2)
    jax.block_until_ready(loss2)
    ref2 = _reference_loss(logits2, labels2)
    assert jnp.allclose(loss2, ref2, atol=1e-4, rtol=1e-4), (loss2, ref2)

    print("KERNEL_OK")
</pallas_src>

<mosaic_0001>
module attributes {stable_mosaic.version = 11 : i64} {
  func.func @kernel(%arg0: i32, %arg1: memref<8x16xf32, #tpu.memory_space<vmem>>, %arg2: memref<8x16xf32, #tpu.memory_space<vmem>>, %arg3: memref<1x8x128xf32, #tpu.memory_space<vmem>>) attributes {dimension_semantics = [#tpu.dimension_semantics<parallel>], iteration_bounds = array<i64: 1>, scalar_prefetch = 0 : i64, scratch_operands = 0 : i64, tpu.core_type = #tpu.core_type<tc>, window_params = [{transform_indices = @transform_0, window_bounds = array<i64: 8, 16>}, {transform_indices = @transform_1, window_bounds = array<i64: 8, 16>}, {transform_indices = @transform_2, window_bounds = array<i64: 1, 8, 128>}]} {
    %c0 = arith.constant 0 : index
    %c0_0 = arith.constant 0 : index
    %0 = vector.load %arg1[%c0, %c0_0] : memref<8x16xf32, #tpu.memory_space<vmem>>, vector<8x16xf32>
    %c0_1 = arith.constant 0 : index
    %c0_2 = arith.constant 0 : index
    %1 = vector.load %arg2[%c0_1, %c0_2] : memref<8x16xf32, #tpu.memory_space<vmem>>, vector<8x16xf32>
    %cst = arith.constant 5.000000e-01 : f32
    %2 = vector.broadcast %cst : f32 to vector<8x16xf32>
    %3 = arith.mulf %1, %2 : vector<8x16xf32>
    %4 = arith.subf %0, %3 : vector<8x16xf32>
    %cst_3 = arith.constant 8.000000e+00 : f32
    %5 = vector.broadcast %cst_3 : f32 to vector<8x16xf32>
    %6 = arith.mulf %5, %4 : vector<8x16xf32>
    %cst_4 = arith.constant dense<0xFF800000> : vector<8xf32>
    %7 = vector.multi_reduction <maximumf>, %6, %cst_4 [1] : vector<8x16xf32> to vector<8xf32>
    %8 = vector.shape_cast %7 : vector<8xf32> to vector<8x1xf32>
    %9 = vector.broadcast %8 : vector<8x1xf32> to vector<8x16xf32>
    %10 = arith.subf %6, %9 : vector<8x16xf32>
    %11 = math.exp %10 : vector<8x16xf32>
    %cst_5 = arith.constant dense<0.000000e+00> : vector<8xf32>
    %12 = vector.multi_reduction <add>, %11, %cst_5 [1] : vector<8x16xf32> to vector<8xf32>
    %13 = vector.shape_cast %12 : vector<8xf32> to vector<8x1xf32>
    %14 = math.log %13 : vector<8x1xf32>
    %cst_6 = arith.constant dense<0.000000e+00> : vector<8xf32>
    %15 = vector.multi_reduction <add>, %1, %cst_6 [1] : vector<8x16xf32> to vector<8xf32>
    %16 = vector.shape_cast %15 : vector<8xf32> to vector<8x1xf32>
    %17 = arith.mulf %1, %6 : vector<8x16xf32>
    %cst_7 = arith.constant dense<0.000000e+00> : vector<8xf32>
    %18 = vector.multi_reduction <add>, %17, %cst_7 [1] : vector<8x16xf32> to vector<8xf32>
    %19 = vector.shape_cast %18 : vector<8xf32> to vector<8x1xf32>
    %cst_8 = arith.constant dense<0.000000e+00> : vector<8xf32>
    %20 = vector.multi_reduction <add>, %6, %cst_8 [1] : vector<8x16xf32> to vector<8xf32>
    %21 = vector.shape_cast %20 : vector<8xf32> to vector<8x1xf32>
    %cst_9 = arith.constant 0.000000e+00 : f32
    %22 = vector.broadcast %cst_9 : f32 to vector<8x1xf32>
    %23 = arith.cmpf oeq, %16, %22 : vector<8x1xf32>
    %24 = arith.select %23, %21, %19 : vector<8x1xi1>, vector<8x1xf32>
    %cst_10 = arith.constant 1.600000e+01 : f32
    %25 = vector.broadcast %cst_10 : f32 to vector<8x1xf32>
    %26 = arith.select %23, %25, %16 : vector<8x1xi1>, vector<8x1xf32>
    %27 = arith.addf %8, %14 : vector<8x1xf32>
    %28 = tpu.reciprocal %26 : vector<8x1xf32> -> vector<8x1xf32>
    %29 = arith.mulf %24, %28 : vector<8x1xf32>
    %30 = arith.subf %27, %29 : vector<8x1xf32>
    %c8_i32 = arith.constant 8 : i32
    %31 = arith.muli %arg0, %c8_i32 : i32
    %32 = tpu.iota {dimensions = array<i32: 0>} : vector<8x1xi32>
    %33 = vector.broadcast %31 : i32 to vector<8x1xi32>
    %34 = arith.addi %33, %32 : vector<8x1xi32>
    %c8_i32_11 = arith.constant 8 : i32
    %35 = vector.broadcast %c8_i32_11 : i32 to vector<8x1xi32>
    %36 = arith.cmpi slt, %34, %35 : vector<8x1xi32>
    %cst_12 = arith.constant 0.000000e+00 : f32
    %37 = vector.broadcast %cst_12 : f32 to vector<8x1xf32>
    %38 = arith.select %36, %30, %37 : vector<8x1xi1>, vector<8x1xf32>
    %39 = vector.shape_cast %38 : vector<8x1xf32> to vector<1x8x1xf32>
    %cst_13 = arith.constant dense<0.000000e+00> : vector<1xf32>
    %40 = vector.multi_reduction <add>, %39, %cst_13 [1, 2] : vector<1x8x1xf32> to vector<1xf32>
    %41 = vector.shape_cast %40 : vector<1xf32> to vector<1x1x1xf32>
    %42 = vector.extract %41[0, 0, 0] : f32 from vector<1x1x1xf32>
    %43 = tpu.iota {dimensions = array<i32: 1>} : vector<1x8x128xi32>
    %44 = tpu.iota {dimensions = array<i32: 2>} : vector<1x8x128xi32>
    %45 = vector.broadcast %42 : f32 to vector<1x8x128xf32>
    %c0_i32 = arith.constant 0 : i32
    %46 = vector.broadcast %c0_i32 : i32 to vector<1x8x128xi32>
    %47 = arith.cmpi eq, %43, %46 : vector<1x8x128xi32>
    %c0_i32_14 = arith.constant 0 : i32
    %48 = vector.broadcast %c0_i32_14 : i32 to vector<1x8x128xi32>
    %49 = arith.cmpi eq, %44, %48 : vector<1x8x128xi32>
    %50 = arith.andi %47, %49 : vector<1x8x128xi1>
    %cst_15 = arith.constant 0.000000e+00 : f32
    %51 = vector.broadcast %cst_15 : f32 to vector<1x8x128xf32>
    %52 = arith.select %50, %45, %51 : vector<1x8x128xi1>, vector<1x8x128xf32>
    %c0_16 = arith.constant 0 : index
    %c0_17 = arith.constant 0 : index
    %c0_18 = arith.constant 0 : index
    %53 = vector.load %arg3[%c0_16, %c0_17, %c0_18] : memref<1x8x128xf32, #tpu.memory_space<vmem>>, vector<1x8x128xf32>
    tpu.vector_store %arg3[%c0_16, %c0_17, %c0_18], %52 {strides = array<i32>} : memref<1x8x128xf32, #tpu.memory_space<vmem>>, vector<1x8x128xf32>,
    return
  }
  func.func @transform_0(%arg0: i32) -> (i32, i32) {
    %c0_i32 = arith.constant 0 : i32
    %c0_i32_0 = arith.constant 0 : i32
    return %arg0, %c0_i32 : i32, i32
  }
  func.func @transform_1(%arg0: i32) -> (i32, i32) {
    %c0_i32 = arith.constant 0 : i32
    %c0_i32_0 = arith.constant 0 : i32
    return %arg0, %c0_i32 : i32, i32
  }
  func.func @transform_2(%arg0: i32) -> (i32, i32, i32) {
    %c0_i32 = arith.constant 0 : i32
    %c0_i32_0 = arith.constant 0 : i32
    %c0_i32_1 = arith.constant 0 : i32
    return %arg0, %c0_i32, %c0_i32_0 : i32, i32, i32
  }
}

</mosaic_0001>

<llo_original>
// kernel: tpu_custom_call.1
$region0: #{tpu_custom_call.1}
  #allocation0 [shape = 'u32[]', space=smem, size = 0x4, offset = 0x4, fixed_abs, tag = 'smem constant byte address 0x4 - core index']
  #allocation1 [shape = 'u32[144,128]{1,0:T(1,128)}', space=vmem, size = 0x12000, scoped, tag = 'internal scratch']
  %s0 = inlined_call_operand.hbm [shape: f32[8,16], index: 0, kind: input, shape index: {}]
  %s1 = inlined_call_operand.hbm [shape: f32[8,16], index: 1, kind: input, shape index: {}]
  %s2 = inlined_call_operand.hbm [shape: f32[1,8,128], index: 2, kind: output, shape index: {}]
  %s3 = sld [smem:[#allocation0]]
  $region26: #{tpu_custom_call.1} parent=0
    _
  %s5 = ssub.s32 1, %s3
  %s6 = scalar_select 0, %s5, %s3
  $region1: #{tpu_custom_call.1} parent=0
    #allocation2 [shape = 'u8[4096]{0}', space=vmem, size = 0x1000, scoped, tag = 'input window, operand 0, single buffered']
    #allocation3 [shape = 's32[1]{0}', space=sflag, size = 0x4, scoped, tag = 'scoped memory for tpu_custom_call.1']
    #allocation4 [shape = 's32[1]{0}', space=sflag, size = 0x4, scoped, tag = 'scoped memory for tpu_custom_call.1']
    #allocation5 [shape = 'u8[4096]{0}', space=vmem, size = 0x1000, scoped, tag = 'input window, operand 1, single buffered']
    #allocation6 [shape = 's32[1]{0}', space=sflag, size = 0x4, scoped, tag = 'scoped memory for tpu_custom_call.1']
    #allocation7 [shape = 'u8[4096]{0}', space=vmem, size = 0x1000, scoped, tag = 'output window, operand 0, single buffered']
    %7 = vsyncpa [#allocation3], 0
    %8 = vsyncpa [#allocation6], 0
    %9 = vsyncpa [#allocation4], 0
    // Predicated region
    $region2: #{tpu_custom_call.1} parent=1 // pred_check
      _
    $region3: #{tpu_custom_call.1} parent=1 // pred_check_branch
      %11 = sbr.rel (0) target = $region5
    $region4: #{tpu_custom_call.1} parent=1 // pred_region
      %s13 = ssub.s32 128, 128
      %14 = vsyncadd [#allocation3], %s13
      %s16 = sshll.u32 [#allocation2], 4
      %s17 = int_to_ptr.vmem [resolvable:$true] %s16
      %19 = dma.hbm_to_vmem [thread:$0]  %s0, 128, %s17, [#allocation3]
    $region5: #{tpu_custom_call.1} parent=1 // pred_fallthru
      _
    // Predicated region
    $region6: #{tpu_custom_call.1} parent=1 // pred_check
      _
    $region7: #{tpu_custom_call.1} parent=1 // pred_check_branch
      %21 = sbr.rel (0) target = $region9
    $region8: #{tpu_custom_call.1} parent=1 // pred_region
      %s23 = ssub.s32 128, 128
      %24 = vsyncadd [#allocation6], %s23
      %s26 = sshll.u32 [#allocation5], 4
      %s27 = int_to_ptr.vmem [resolvable:$true] %s26
      %29 = dma.hbm_to_vmem [thread:$0]  %s1, 128, %s27, [#allocation6]
    $region9: #{tpu_custom_call.1} parent=1 // pred_fallthru
      _
    // Predicated region
    $region10: #{tpu_custom_call.1} parent=1 // pred_check
      _
    $region11: #{tpu_custom_call.1} parent=1 // pred_check_branch
      %31 = sbr.rel (0) target = $region13
    $region12: #{tpu_custom_call.1} parent=1 // pred_region
      %32 = dma.done [#allocation3], 128
    $region13: #{tpu_custom_call.1} parent=1 // pred_fallthru
      _
    // Predicated region
    $region14: #{tpu_custom_call.1} parent=1 // pred_check
      _
    $region15: #{tpu_custom_call.1} parent=1 // pred_check_branch
      %34 = sbr.rel (0) target = $region17
    $region16: #{tpu_custom_call.1} parent=1 // pred_region
      %35 = dma.done [#allocation6], 128
    $region17: #{tpu_custom_call.1} parent=1 // pred_fallthru
      _
    %v36 = vld [vmem:[#allocation2] sm:$0xff]
    %v37 = vld [vmem:[#allocation5] sm:$0xff]
    %v38 = vmul.f32 %v37, 0.5
    %v39 = vsub.f32 %v36, %v38
    %v40 = vmul.f32 %v39, 8.0
    %vm41 = vcmask 130048
    %v42 = vsel %vm41, %v40, -inf
    %43 = vmax.xlane.f32.xlu0 %v42
    %v44 = vpop.xlane.xlu0 %43
    %v45 = vsub.f32 %v40, %v44
    %v46 = vmul.f32 %v45, 1.442695
    %v47 = vpow.pop %v46
    %v48 = vsel %vm41, %v47, 0.0
    %49 = vadd.xlane.f32.xlu0 %v48
    %v50 = vpop.xlane.xlu0 %49
    %v51 = vlog2.pop %v50
    %v52 = vmul.f32 %v51, 0.6931472
    %v53 = vsel %vm41, %v37, 0.0
    %54 = vadd.xlane.f32.xlu0 %v53
    %v55 = vpop.xlane.xlu0 %54
    %v56 = vmul.f32 %v37, %v40
    %v57 = vsel %vm41, %v56, 0.0
    %58 = vadd.xlane.f32.xlu0 %v57
    %v59 = vpop.xlane.xlu0 %58
    %v60 = vsel %vm41, %v40, 0.0
    %61 = vadd.xlane.f32.xlu0 %v60
    %v62 = vpop.xlane.xlu0 %61
    %vm63 = vcmp.eq.f32.partialorder %v55, 0.0
    %v64 = vsel %vm63, %v62, %v59
    %v65 = vsel %vm63, 16.0, %v55
    %v66 = vadd.f32 %v44, %v52
    %v67 = vrcp.pop %v65
    %v68 = vmul.f32 %v64, %v67
    %v69 = vsub.f32 %v66, %v68
    %s70 = smul.u32 0, 8
    %v71 = vlaneseq
    %v72 = vshrl.u32 %v71, 7
    %v73 = vstv %s70
    %v74 = vadd.s32 %v73, %v72
    %vm75 = vcmp.lt.s32.totalorder %v74, 8
    %v76 = vsel %vm75, %v69, 0.0
    %vm77 = vcmask 7168
    %v78 = vsel %vm77, %v76, 0.0
    %79 = vadd.xlane.f32.xlu0 %v78
    %v80 = vpop.xlane.xlu0 %79
    %v81 = vrot.slane %v80, 4
    %v82 = vadd.f32 %v80, %v81
    %v83 = vrot.slane %v82, 2
    %v84 = vadd.f32 %v82, %v83
    %v85 = vrot.slane %v84, 1
    %v86 = vadd.f32 %v84, %v85
    %s87 = vtos %v86
    %v88 = vlaneseq
    %v89 = vand.u32 %v88, 127
    %v90 = vstv %s87
    %vm91 = vcmp.eq.s32.totalorder %v72, 0
    %vm92 = vcmp.eq.s32.totalorder %v89, 0
    %vm93 = vmand %vm91, %vm92
    %v94 = vsel %vm93, %v90, 0.0
    %95 = vst [vmem:[#allocation7] sm:$0xff] %v94
    // Predicated region
    $region18: #{tpu_custom_call.1} parent=1 // pred_check
      _
    $region19: #{tpu_custom_call.1} parent=1 // pred_check_branch
      %97 = sbr.rel (0) target = $region21
    $region20: #{tpu_custom_call.1} parent=1 // pred_region
      %s99 = ssub.s32 128, 128
      %100 = vsyncadd [#allocation4], %s99
      %s102 = sshll.u32 [#allocation7], 4
      %s103 = int_to_ptr.vmem [resolvable:$true] %s102
      %105 = dma.vmem_to_hbm [thread:$0]  %s103, 128, %s2, [#allocation4]
    $region21: #{tpu_custom_call.1} parent=1 // pred_fallthru
      _
    // Predicated region
    $region22: #{tpu_custom_call.1} parent=1 // pred_check
      _
    $region23: #{tpu_custom_call.1} parent=1 // pred_check_branch
      %107 = sbr.rel (0) target = $region25
    $region24: #{tpu_custom_call.1} parent=1 // pred_region
      %108 = dma.done [#allocation4], 128
    $region25: #{tpu_custom_call.1} parent=1 // pred_fallthru
      _
    %109 = vsyncpa [#allocation3], 1
    %110 = vsyncpa [#allocation6], 1
    %111 = vsyncpa [#allocation4], 1

</llo_original>
